<compile_context>
chip_gen: v5e
topology: v5e:2x2
jax: 0.10.0
libtpu: 0.0.40
codegen_flags: <defaults>
</compile_context>

<pallas_src>
import jax
import jax.numpy as jnp
from jax.experimental import pallas as pl
from jax.experimental.pallas import tpu as pltpu

MAX_SEQ_LEN = 100
INPUT_SIZE = 2
FEAT = MAX_SEQ_LEN * INPUT_SIZE      # 200  (original flattened feature count)
FEAT_PAD = 256                       # lane-dense: next multiple of 128
N_SV = 32                            # synthetic number of support vectors
N_SV_PAD = 128                       # pad SVs to a full vreg lane/sublane width
LANE = 128                           # batch (lane axis) granularity
MAX_BATCH_TILE = 1024                # queries per grid step (review: 512-2048)


def _make_svc_rbf_kernel(gamma, intercept, cls0, cls1):
    """RBF-SVM decision kernel, transposed layout, fitted scalars baked in."""
    gamma = float(gamma)
    intercept = float(intercept)
    cls0 = float(cls0)
    cls1 = float(cls1)

    def kernel(xt_ref, sv_ref, params_ref, out_ref):
        # xt_ref:     (FEAT_PAD, TB)        queries, transposed (batch on lanes)
        # sv_ref:     (N_SV_PAD, FEAT_PAD)  support vectors (SVs on sublanes)
        # params_ref: (N_SV_PAD, 2)         col 0 = ||sv||^2, col 1 = dual coef
        # out_ref:    (1, TB)               predicted labels, lane-dense row
        xt = xt_ref[...]
        sv = sv_ref[...]
        svn2 = params_ref[:, 0:1]            # (N_SV_PAD, 1)
        dual = params_ref[:, 1:2]            # (N_SV_PAD, 1)

        # ||x - sv||^2 = ||sv||^2 - 2 * sv.x + ||x||^2 ; cross term on the MXU.
        xf = xt.astype(jnp.float32)
        xn2 = jnp.sum(xf * xf, axis=0, keepdims=True)                     # (1, TB)
        cross = jnp.dot(sv, xt, preferred_element_type=jnp.float32)       # (N_SV_PAD, TB)
        d2 = jnp.maximum(svn2 + xn2 - 2.0 * cross, 0.0)                   # clamp cancellation

        k = jnp.exp(-gamma * d2)                                          # (N_SV_PAD, TB)
        dec = jnp.sum(dual * k, axis=0, keepdims=True) + intercept        # (1, TB)

        # sklearn binary SVC: classes_[1] if decision > 0 else classes_[0]
        out_ref[...] = jnp.where(dec > 0.0, cls1, cls0).astype(out_ref.dtype)

    return kernel


def _prepare_svm(support_vectors, dual_coef, mxu_dtype=jnp.float32):
    """Host-side, one-time layout prep of the fitted SVM parameters."""
    sv = jnp.asarray(support_vectors, jnp.float32)                 # (n_sv, feat)
    n_sv, feat = sv.shape
    assert n_sv <= N_SV_PAD and feat <= FEAT_PAD
    sv_pad = jnp.pad(sv, ((0, N_SV_PAD - n_sv), (0, FEAT_PAD - feat)))
    sv_pad = sv_pad.astype(mxu_dtype)                              # (N_SV_PAD, FEAT_PAD)
    sv_f32 = sv_pad.astype(jnp.float32)
    sv_norm2 = jnp.sum(sv_f32 * sv_f32, axis=-1, keepdims=True)    # (N_SV_PAD, 1)
    dual = jnp.asarray(dual_coef, jnp.float32).reshape(-1)         # (n_sv,)
    dual_pad = jnp.pad(dual, (0, N_SV_PAD - n_sv)).reshape(-1, 1)  # zero duals for pad SVs
    params = jnp.concatenate([sv_norm2, dual_pad], axis=1)         # (N_SV_PAD, 2)
    return sv_pad, params


def _pad_queries(X):
    """Zero-pad sequences to MAX_SEQ_LEN and flatten (module's forward glue)."""
    B, x_len, _ = X.shape
    assert x_len <= MAX_SEQ_LEN, "module assumes x_len <= max_seq_len"
    padded = jnp.pad(X.astype(jnp.float32),
                     ((0, 0), (0, MAX_SEQ_LEN - x_len), (0, 0)))
    flat = padded.reshape(B, FEAT)
    return jnp.pad(flat, ((0, 0), (0, FEAT_PAD - FEAT)))           # (B, FEAT_PAD)


def cumul_svc_predict(x_flat_pad, sv_pad, params, gamma, intercept, classes):
    """Batched RBF-SVM predict. x_flat_pad: (B, FEAT_PAD). Returns (B,) labels."""
    B = x_flat_pad.shape[0]

    # Batch padded to a lane-dense multiple of 128; pick the batch tile.
    b_pad = pl.cdiv(B, LANE) * LANE
    tb = min(MAX_BATCH_TILE, b_pad)
    # v7x: keep >= 2 grid steps so the "parallel" axis shards across both TCs.
    if b_pad >= 2 * LANE:
        tb = min(tb, pl.cdiv(pl.cdiv(b_pad, 2), LANE) * LANE)
    b_pad = pl.cdiv(b_pad, tb) * tb
    if b_pad != B:
        x_flat_pad = jnp.pad(x_flat_pad, ((0, b_pad - B), (0, 0)))

    # Transposed, lane-dense query slab (batch on the lane axis), MXU dtype.
    xt = x_flat_pad.T.astype(sv_pad.dtype)                         # (FEAT_PAD, b_pad)

    kernel = _make_svc_rbf_kernel(gamma, intercept, classes[0], classes[1])

    out = pl.pallas_call(
        kernel,
        out_shape=jax.ShapeDtypeStruct((1, b_pad), jnp.float32),
        grid=(b_pad // tb,),
        in_specs=[
            pl.BlockSpec((FEAT_PAD, tb), lambda i: (0, i)),        # queries (tiled over batch)
            pl.BlockSpec((N_SV_PAD, FEAT_PAD), lambda i: (0, 0)),  # support vectors (resident)
            pl.BlockSpec((N_SV_PAD, 2), lambda i: (0, 0)),         # [||sv||^2, dual] (resident)
        ],
        out_specs=pl.BlockSpec((1, tb), lambda i: (0, i)),         # lane-dense output row
        compiler_params=pltpu.CompilerParams(
            dimension_semantics=("parallel",)),
    )(xt, sv_pad, params)

    return out[0, :B]


def cumul_discriminator_forward_batched(X_batch, support_vectors, dual_coef,
                                        gamma, intercept, classes,
                                        use_bf16_mxu=False):
    """Batched variant: X_batch (B, x_len, INPUT_SIZE) -> (B,) predicted labels."""
    mxu_dtype = jnp.bfloat16 if use_bf16_mxu else jnp.float32
    x_flat = _pad_queries(X_batch)
    sv_pad, params = _prepare_svm(support_vectors, dual_coef, mxu_dtype=mxu_dtype)
    return cumul_svc_predict(x_flat, sv_pad, params, gamma, intercept, classes)


def cumul_discriminator_forward(X, support_vectors, dual_coef,
                                gamma, intercept, classes):
    """Mirrors CUMULDisciminator.forward exactly: X (1, x_len, 2) -> (1,) label.

    Note: a single ~17-KFLOP query is launch-overhead bound; prefer the batched
    entry point.  Kept on the Pallas path for module parity.
    """
    pred = cumul_discriminator_forward_batched(X, support_vectors, dual_coef,
                                               gamma, intercept, classes)
    return pred.reshape(1)


def _reference_forward_batched(X, support_vectors, dual_coef,
                               gamma, intercept, classes):
    """Pure-JAX reference (direct diff form, no MXU expansion)."""
    B, x_len, _ = X.shape
    padded = jnp.pad(X.astype(jnp.float32),
                     ((0, 0), (0, MAX_SEQ_LEN - x_len), (0, 0)))
    x = padded.reshape(B, FEAT)
    d2 = jnp.sum((x[:, None, :] - support_vectors[None, :, :]) ** 2, axis=-1)  # (B, N_SV)
    dec = jnp.sum(dual_coef.reshape(1, -1) * jnp.exp(-gamma * d2), axis=-1) + intercept
    return jnp.where(dec > 0.0, classes[1], classes[0])


if __name__ == "__main__":
    key = jax.random.PRNGKey(0)
    k_x, k_sv, k_dual = jax.random.split(key, 3)

    # Deterministic inputs consistent with the module's forward(): sequences of
    # length 8 with input_size=2.  B=200 exercises the multi-tile grid path
    # (two batch tiles); the B=1 module-exact path is also exercised.
    x_len = 8
    B = 200
    Xb = jax.random.normal(k_x, (B, x_len, INPUT_SIZE), dtype=jnp.float32)

    # Deterministic synthetic "fitted" SVM parameters (no checkpoint load).
    # TODO(synk): SVC.fit (sklearn training) has no Pallas equivalent; only the
    # fitted-model forward/predict path is implemented here.
    support_vectors = jax.random.normal(k_sv, (N_SV, FEAT), dtype=jnp.float32)
    dual_coef = jax.random.normal(k_dual, (N_SV, 1), dtype=jnp.float32)
    gamma = 1.0 / FEAT
    intercept = 0.1
    classes = (0.0, 1.0)

    # Batched path (primary), f32 MXU operands -> exact match with reference.
    preds = cumul_discriminator_forward_batched(Xb, support_vectors, dual_coef,
                                                gamma, intercept, classes)
    preds = jax.block_until_ready(preds)

    # Single-sample path, exactly mirroring the module's forward semantics.
    pred1 = cumul_discriminator_forward(Xb[:1], support_vectors, dual_coef,
                                        gamma, intercept, classes)
    pred1 = jax.block_until_ready(pred1)

    ref = _reference_forward_batched(Xb, support_vectors, dual_coef,
                                     gamma, intercept, classes)
    assert preds.shape == (B,)
    assert pred1.shape == (1,)
    assert jnp.allclose(preds, ref), (preds, ref)
    assert jnp.allclose(pred1, ref[:1]), (pred1, ref[:1])

    # bf16-MXU large-batch variant (v6e/v7x memory-bound regime); labels may
    # legitimately differ for decisions extremely close to 0, so only require
    # high agreement rather than exact equality.
    preds_bf16 = cumul_discriminator_forward_batched(
        Xb, support_vectors, dual_coef, gamma, intercept, classes,
        use_bf16_mxu=True)
    preds_bf16 = jax.block_until_ready(preds_bf16)
    assert preds_bf16.shape == (B,)
    assert float(jnp.mean(preds_bf16 == ref)) >= 0.9

    print("KERNEL_OK")
</pallas_src>

<mosaic_0001>
module attributes {stable_mosaic.version = 11 : i64} {
  func.func @kernel(%arg0: i32, %arg1: memref<256x128xf32, #tpu.memory_space<vmem>>, %arg2: memref<128x256xf32, #tpu.memory_space<vmem>>, %arg3: memref<128x2xf32, #tpu.memory_space<vmem>>, %arg4: memref<1x128xf32, #tpu.memory_space<vmem>>) attributes {dimension_semantics = [#tpu.dimension_semantics<parallel>], iteration_bounds = array<i64: 2>, scalar_prefetch = 0 : i64, scratch_operands = 0 : i64, tpu.core_type = #tpu.core_type<tc>, window_params = [{transform_indices = @transform_0, window_bounds = array<i64: 256, 128>}, {pipeline_mode = #tpu.pipeline_mode<synchronous>, transform_indices = @transform_1, window_bounds = array<i64: 128, 256>}, {pipeline_mode = #tpu.pipeline_mode<synchronous>, transform_indices = @transform_2, window_bounds = array<i64: 128, 2>}, {transform_indices = @transform_3, window_bounds = array<i64: 1, 128>}]} {
    %c0 = arith.constant 0 : index
    %c0_0 = arith.constant 0 : index
    %0 = vector.load %arg1[%c0, %c0_0] : memref<256x128xf32, #tpu.memory_space<vmem>>, vector<256x128xf32>
    %c0_1 = arith.constant 0 : index
    %c0_2 = arith.constant 0 : index
    %1 = vector.load %arg2[%c0_1, %c0_2] : memref<128x256xf32, #tpu.memory_space<vmem>>, vector<128x256xf32>
    %c0_3 = arith.constant 0 : index
    %c0_4 = arith.constant 0 : index
    %2 = vector.load %arg3[%c0_3, %c0_4] : memref<128x2xf32, #tpu.memory_space<vmem>>, vector<128x1xf32>
    %c0_5 = arith.constant 0 : index
    %c1 = arith.constant 1 : index
    %3 = vector.load %arg3[%c0_5, %c1] : memref<128x2xf32, #tpu.memory_space<vmem>>, vector<128x1xf32>
    %4 = arith.mulf %0, %0 : vector<256x128xf32>
    %cst = arith.constant dense<0.000000e+00> : vector<128xf32>
    %5 = vector.multi_reduction <add>, %4, %cst [0] : vector<256x128xf32> to vector<128xf32>
    %6 = vector.shape_cast %5 : vector<128xf32> to vector<1x128xf32>
    %cst_6 = arith.constant dense<0.000000e+00> : vector<128x128xf32>
    %7 = tpu.matmul %1, %0, %cst_6 {dimension_numbers = #tpu.dot_dimension_numbers<[1], [0], [0], [1], [0, 0, 1, 1], [], []>} : vector<128x256xf32>, vector<256x128xf32>, vector<128x128xf32> -> vector<128x128xf32>
    %8 = vector.broadcast %2 : vector<128x1xf32> to vector<128x128xf32>
    %9 = vector.broadcast %6 : vector<1x128xf32> to vector<128x128xf32>
    %10 = arith.addf %8, %9 : vector<128x128xf32>
    %cst_7 = arith.constant 2.000000e+00 : f32
    %11 = vector.broadcast %cst_7 : f32 to vector<128x128xf32>
    %12 = arith.mulf %11, %7 : vector<128x128xf32>
    %13 = arith.subf %10, %12 : vector<128x128xf32>
    %cst_8 = arith.constant 0.000000e+00 : f32
    %14 = vector.broadcast %cst_8 : f32 to vector<128x128xf32>
    %15 = arith.maximumf %13, %14 : vector<128x128xf32>
    %cst_9 = arith.constant -5.000000e-03 : f32
    %16 = vector.broadcast %cst_9 : f32 to vector<128x128xf32>
    %17 = arith.mulf %16, %15 : vector<128x128xf32>
    %18 = math.exp %17 : vector<128x128xf32>
    %19 = vector.broadcast %3 : vector<128x1xf32> to vector<128x128xf32>
    %20 = arith.mulf %19, %18 : vector<128x128xf32>
    %cst_10 = arith.constant dense<0.000000e+00> : vector<128xf32>
    %21 = vector.multi_reduction <add>, %20, %cst_10 [0] : vector<128x128xf32> to vector<128xf32>
    %22 = vector.shape_cast %21 : vector<128xf32> to vector<1x128xf32>
    %cst_11 = arith.constant 1.000000e-01 : f32
    %23 = vector.broadcast %cst_11 : f32 to vector<1x128xf32>
    %24 = arith.addf %22, %23 : vector<1x128xf32>
    %cst_12 = arith.constant 0.000000e+00 : f32
    %25 = vector.broadcast %cst_12 : f32 to vector<1x128xf32>
    %26 = arith.cmpf ogt, %24, %25 : vector<1x128xf32>
    %cst_13 = arith.constant 1.000000e+00 : f32
    %cst_14 = arith.constant 0.000000e+00 : f32
    %27 = vector.broadcast %cst_13 : f32 to vector<1x128xf32>
    %28 = vector.broadcast %cst_14 : f32 to vector<1x128xf32>
    %29 = arith.select %26, %27, %28 : vector<1x128xi1>, vector<1x128xf32>
    %c0_15 = arith.constant 0 : index
    %c0_16 = arith.constant 0 : index
    %30 = vector.load %arg4[%c0_15, %c0_16] : memref<1x128xf32, #tpu.memory_space<vmem>>, vector<1x128xf32>
    tpu.vector_store %arg4[%c0_15, %c0_16], %29 {strides = array<i32>} : memref<1x128xf32, #tpu.memory_space<vmem>>, vector<1x128xf32>,
    return
  }
  func.func @transform_0(%arg0: i32) -> (i32, i32) {
    %c0_i32 = arith.constant 0 : i32
    %c0_i32_0 = arith.constant 0 : i32
    return %c0_i32, %arg0 : i32, i32
  }
  func.func @transform_1(%arg0: i32) -> (i32, i32) {
    %c0_i32 = arith.constant 0 : i32
    %c0_i32_0 = arith.constant 0 : i32
    %c0_i32_1 = arith.constant 0 : i32
    return %c0_i32, %c0_i32_0 : i32, i32
  }
  func.func @transform_2(%arg0: i32) -> (i32, i32) {
    %c0_i32 = arith.constant 0 : i32
    %c0_i32_0 = arith.constant 0 : i32
    %c0_i32_1 = arith.constant 0 : i32
    return %c0_i32, %c0_i32_0 : i32, i32
  }
  func.func @transform_3(%arg0: i32) -> (i32, i32) {
    %c0_i32 = arith.constant 0 : i32
    %c0_i32_0 = arith.constant 0 : i32
    return %c0_i32, %arg0 : i32, i32
  }
}

</mosaic_0001>

<llo_original>
// kernel: tpu_custom_call.1
$region0: #{tpu_custom_call.1}
  #allocation0 [shape = 'u32[]', space=smem, size = 0x4, offset = 0x4, fixed_abs, tag = 'smem constant byte address 0x4 - core index']
  #allocation1 [shape = 'u32[72,128]{1,0:T(1,128)}', space=vmem, size = 0x9000, scoped, tag = 'internal scratch']
  %s0 = inlined_call_operand.hbm [shape: f32[256,256], index: 0, kind: input, shape index: {}]
  %s1 = inlined_call_operand.hbm [shape: f32[128,256], index: 1, kind: input, shape index: {}]
  %s2 = inlined_call_operand.vmem [shape: f32[128,2], index: 2, kind: input, shape index: {}]
  %s3 = inlined_call_operand.hbm [shape: f32[1,256], index: 3, kind: output, shape index: {}]
  %s4 = sld [smem:[#allocation0]]
  $region53: #{tpu_custom_call.1} parent=0
    _
  %s6 = ssub.s32 1, %s4
  %s7 = scalar_select 0, %s6, %s4
  $region1: #{tpu_custom_call.1} parent=0
    #allocation2 [shape = 'u8[262144]{0}', space=vmem, size = 0x40000, scoped, tag = 'input window, operand 0']
    #allocation3 [shape = 's32[2]{0}', space=sflag, size = 0x8, scoped, tag = 'scoped memory for tpu_custom_call.1']
    #allocation4 [shape = 's32[2]{0}', space=sflag, size = 0x8, scoped, tag = 'scoped memory for tpu_custom_call.1']
    #allocation5 [shape = 'u8[131072]{0}', space=vmem, size = 0x20000, scoped, tag = 'input window, operand 1, single buffered']
    #allocation6 [shape = 's32[1]{0}', space=sflag, size = 0x4, scoped, tag = 'scoped memory for tpu_custom_call.1']
    #allocation7 [shape = 'u8[1024]{0}', space=vmem, size = 0x400, scoped, tag = 'output window, operand 0']
    %8 = vsyncpa [#allocation3], 0
    %s9 = scalar_lea.sflag [#allocation3], 1
    %10 = vsyncpa %s9, 0
    %11 = vsyncpa [#allocation6], 0
    %12 = vsyncpa [#allocation4], 0
    %s13 = scalar_lea.sflag [#allocation4], 1
    %14 = vsyncpa %s13, 0
    loop: start=0, step=1, limit=4
    $region2: #{tpu_custom_call.1} parent=1 // loop_pre_header
      _
    $region3: #{tpu_custom_call.1} parent=1 // loop_header
      %s16 = sphi 0, %s20
      %p17 = scmp.ge.s32.totalorder %s16, 4
      %s26 = sphi 0, %s28
      %s29 = sphi 0, %s26
      %s30 = sphi 0, %s29
      %s46 = sphi 0, %s30
      %s50 = sphi 0, %s50
      %s52 = sphi 0, %s50
      %s53 = sphi 0, %s52
      %s67 = sphi 0, %s53
      %s71 = sphi 0, %s71
      %s73 = sphi 0, %s71
      %s74 = sphi 0, %s73
      %s88 = sphi 0, %s74
      %s94 = sphi 0, %s96
      %s97 = sphi 0, %s94
      %s98 = sphi 0, %s97
      %s114 = sphi 0, %s98
    $region4: #{tpu_custom_call.1} parent=1 // loop_header_branch
      %19 = sbr.rel (%p17) target = $region8
    $region5: #{tpu_custom_call.1} parent=1 // loop_body
      %s21 = ssub.s32 %s16, 1
      %s22 = ssub.s32 %s16, 2
      %s23 = sadd.s32 %s16, 1
      %s24 = ssub.s32 %s16, %s23
      %p25 = scmp.eq.s32.totalorder %s24, 0
      %s27 = sadd.s32 %s26, 1
      %s28 = scalar_select %p25, %s26, %s27
      %p31 = pneg %p25
      %p32 = scmp.eq.s32.totalorder %s16, 1
      %p33 = por %p31, %p32
      %p34 = scmp.ne.s32.totalorder %s26, %s29
      %p35 = scmp.eq.s32.totalorder %s16, 0
      %p36 = por %p34, %p35
      %p37 = scmp.ne.s32.totalorder %s26, %s29
      %p38 = scmp.eq.s32.totalorder %s21, 1
      %p39 = por %p37, %p38
      %p40 = scmp.ne.s32.totalorder %s29, %s30
      %p41 = scmp.eq.s32.totalorder %s21, 0
      %p42 = por %p40, %p41
      %p43 = scmp.ne.s32.totalorder %s29, %s30
      %p44 = scmp.eq.s32.totalorder %s22, 1
      %p45 = por %p43, %p44
      %p47 = scmp.ne.s32.totalorder %s30, %s46
      %p48 = scmp.eq.s32.totalorder %s22, 0
      %p49 = por %p47, %p48
      %s51 = sadd.s32 %s50, 1
      %p54 = scmp.eq.s32.totalorder %s16, 1
      %p55 = scmp.ne.s32.totalorder %s50, %s52
      %p56 = scmp.eq.s32.totalorder %s16, 0
      %p57 = por %p55, %p56
      %p58 = scmp.ne.s32.totalorder %s50, %s52
      %p59 = scmp.eq.s32.totalorder %s21, 1
      %p60 = por %p58, %p59
      %p61 = scmp.ne.s32.totalorder %s52, %s53
      %p62 = scmp.eq.s32.totalorder %s21, 0
      %p63 = por %p61, %p62
      %p64 = scmp.ne.s32.totalorder %s52, %s53
      %p65 = scmp.eq.s32.totalorder %s22, 1
      %p66 = por %p64, %p65
      %p68 = scmp.ne.s32.totalorder %s53, %s67
      %p69 = scmp.eq.s32.totalorder %s22, 0
      %p70 = por %p68, %p69
      %s72 = sadd.s32 %s71, 1
      %p75 = scmp.eq.s32.totalorder %s16, 1
      %p76 = scmp.ne.s32.totalorder %s71, %s73
      %p77 = scmp.eq.s32.totalorder %s16, 0
      %p78 = por %p76, %p77
      %p79 = scmp.ne.s32.totalorder %s71, %s73
      %p80 = scmp.eq.s32.totalorder %s21, 1
      %p81 = por %p79, %p80
      %p82 = scmp.ne.s32.totalorder %s73, %s74
      %p83 = scmp.eq.s32.totalorder %s21, 0
      %p84 = por %p82, %p83
      %p85 = scmp.ne.s32.totalorder %s73, %s74
      %p86 = scmp.eq.s32.totalorder %s22, 1
      %p87 = por %p85, %p86
      %p89 = scmp.ne.s32.totalorder %s74, %s88
      %p90 = scmp.eq.s32.totalorder %s22, 0
      %p91 = por %p89, %p90
      %s92 = ssub.s32 %s16, %s23
      %p93 = scmp.eq.s32.totalorder %s92, 0
      %s95 = sadd.s32 %s94, 1
      %s96 = scalar_select %p93, %s94, %s95
      %p99 = pneg %p93
      %p100 = scmp.eq.s32.totalorder %s16, 1
      %p101 = por %p99, %p100
      %p102 = scmp.ne.s32.totalorder %s94, %s97
      %p103 = scmp.eq.s32.totalorder %s16, 0
      %p104 = por %p102, %p103
      %p105 = scmp.ne.s32.totalorder %s94, %s97
      %p106 = scmp.eq.s32.totalorder %s21, 1
      %p107 = por %p105, %p106
      %p108 = scmp.ne.s32.totalorder %s97, %s98
      %p109 = scmp.eq.s32.totalorder %s21, 0
      %p110 = por %p108, %p109
      %p111 = scmp.ne.s32.totalorder %s97, %s98
      %p112 = scmp.eq.s32.totalorder %s22, 1
      %p113 = por %p111, %p112
      %p115 = scmp.ne.s32.totalorder %s98, %s114
      %p116 = scmp.eq.s32.totalorder %s22, 0
      %p117 = por %p115, %p116
      %p118 = scmp.le.s32.totalorder 1, %s16
      %p119 = scmp.lt.s32.totalorder %s16, 3
      %p120 = pnand %p118, %p119
      %p121 = pneg %p120
      // Predicated region
      $region9: #{tpu_custom_call.1} parent=5 // pred_check
        _
      $region10: #{tpu_custom_call.1} parent=5 // pred_check_branch
        %123 = sbr.rel (%p120) target = $region12
      $region11: #{tpu_custom_call.1} parent=5 // pred_region
        %s124 = ssub.s32 %s16, 1
        // Predicated region
        $region13: #{tpu_custom_call.1} parent=11 // pred_check
          %p125 = pneg %p63
        $region14: #{tpu_custom_call.1} parent=11 // pred_check_branch
          %127 = sbr.rel (%p125) target = $region16
        $region15: #{tpu_custom_call.1} parent=11 // pred_region
          %129 = vsyncadd [#allocation6], 0
          %s130 = sshll.u32 %s1, 4
          %s131 = int_to_ptr.hbm [resolvable:$true] %s130
          %s132 = sshll.u32 [#allocation5], 4
          %s133 = int_to_ptr.vmem [resolvable:$true] %s132
          %138 = dma.hbm_to_vmem [thread:$0]  %s131, 4096, %s133, [#allocation6], 256, 256, 16
        $region16: #{tpu_custom_call.1} parent=11 // pred_fallthru
          _
        // Predicated region
        $region17: #{tpu_custom_call.1} parent=11 // pred_check
          %p139 = pneg %p84
        $region18: #{tpu_custom_call.1} parent=11 // pred_check_branch
          %141 = sbr.rel (%p139) target = $region20
        $region19: #{tpu_custom_call.1} parent=11 // pred_region
          _
        $region20: #{tpu_custom_call.1} parent=11 // pred_fallthru
          _
      $region12: #{tpu_custom_call.1} parent=5 // pred_fallthru
        _
      %p142 = scmp.lt.s32.totalorder %s16, 2
      // Predicated region
      $region21: #{tpu_custom_call.1} parent=5 // pred_check
        %p143 = pneg %p142
      $region22: #{tpu_custom_call.1} parent=5 // pred_check_branch
        %145 = sbr.rel (%p143) target = $region24
      $region23: #{tpu_custom_call.1} parent=5 // pred_region
        // Predicated region
        $region25: #{tpu_custom_call.1} parent=23 // pred_check
          %p146 = pneg %p36
        $region26: #{tpu_custom_call.1} parent=23 // pred_check_branch
          %148 = sbr.rel (%p146) target = $region28
        $region27: #{tpu_custom_call.1} parent=23 // pred_region
          %s149 = sand.u32 %s26, 1
          %s150 = scalar_lea.sflag [#allocation3], %s149
          %s151 = sand.u32 %s26, 1
          %s152 = smul.addr %s151, 256
          %s153 = scalar_lea.vmem [#allocation2], %s152
          %155 = vsyncadd %s150, 0
          %s156 = smul.addr %s16, 8
          %s157 = scalar_lea.hbm %s0, %s156
          %s158 = sshll.u32 %s157, 4
          %s159 = int_to_ptr.hbm [resolvable:$true] %s158
          %s160 = sshll.u32 %s153, 4
          %s161 = int_to_ptr.vmem [resolvable:$true] %s160
          %166 = dma.hbm_to_vmem [thread:$0]  %s159, 4096, %s161, %s150, 256, 128, 8
        $region28: #{tpu_custom_call.1} parent=23 // pred_fallthru
          _
      $region24: #{tpu_custom_call.1} parent=5 // pred_fallthru
        _
      %p167 = scmp.le.s32.totalorder 1, %s16
      %p168 = scmp.lt.s32.totalorder %s16, 3
      %p169 = pnand %p167, %p168
      %p170 = pneg %p169
      // Predicated region
      $region29: #{tpu_custom_call.1} parent=5 // pred_check
        _
      $region30: #{tpu_custom_call.1} parent=5 // pred_check_branch
        %172 = sbr.rel (%p169) target = $region32
      $region31: #{tpu_custom_call.1} parent=5 // pred_region
        %s173 = ssub.s32 %s16, 1
        %s174 = sand.u32 %s29, 1
        %s175 = scalar_lea.sflag [#allocation3], %s174
        %s176 = sand.u32 %s29, 1
        %s177 = smul.addr %s176, 256
        %s178 = scalar_lea.vmem [#allocation2], %s177
        // Predicated region
        $region33: #{tpu_custom_call.1} parent=31 // pred_check
          %p179 = pneg %p42
        $region34: #{tpu_custom_call.1} parent=31 // pred_check_branch
          %181 = sbr.rel (%p179) target = $region36
        $region35: #{tpu_custom_call.1} parent=31 // pred_region
          %183 = dma.done %s175, 4096
        $region36: #{tpu_custom_call.1} parent=31 // pred_fallthru
          _
        // Predicated region
        $region37: #{tpu_custom_call.1} parent=31 // pred_check
          %p184 = pneg %p63
        $region38: #{tpu_custom_call.1} parent=31 // pred_check_branch
          %186 = sbr.rel (%p184) target = $region40
        $region39: #{tpu_custom_call.1} parent=31 // pred_region
          %188 = dma.done [#allocation6], 4096
        $region40: #{tpu_custom_call.1} parent=31 // pred_fallthru
          _
        %s189 = sand.u32 %s29, 1
        %s190 = scalar_lea.sflag [#allocation3], %s189
        %s191 = sand.u32 %s29, 1
        %s192 = smul.addr %s191, 256
        %s193 = scalar_lea.vmem [#allocation2], %s192
        %p194 = pneg %p42
        %p195 = pneg %p39
        %p196 = pneg %p63
        %p197 = pneg %p60
        %p198 = pneg %p84
        %p199 = pneg %p81
        %p200 = pneg %p110
        %p201 = pneg %p107
        %s202 = sand.u32 %s97, 1
        %s203 = scalar_lea.sflag [#allocation4], %s202
        %s204 = sand.u32 %s97, 1
        %s205 = scalar_lea.vmem [#allocation7], %s204
        %v206 = vld [vmem:[%s178] sm:$0xff]
        %v207 = vld [vmem:[%s178 + $0x8] sm:$0xff]
        %v208 = vld [vmem:[%s178 + $0x10] sm:$0xff]
        %v209 = vld [vmem:[%s178 + $0x18] sm:$0xff]
        %v210 = vld [vmem:[%s178 + $0x20] sm:$0xff]
        %v211 = vld [vmem:[%s178 + $0x28] sm:$0xff]
        %v212 = vld [vmem:[%s178 + $0x30] sm:$0xff]
        %v213 = vld [vmem:[%s178 + $0x38] sm:$0xff]
        %v214 = vld [vmem:[%s178 + $0x40] sm:$0xff]
        %v215 = vld [vmem:[%s178 + $0x48] sm:$0xff]
        %v216 = vld [vmem:[%s178 + $0x50] sm:$0xff]
        %v217 = vld [vmem:[%s178 + $0x58] sm:$0xff]
        %v218 = vld [vmem:[%s178 + $0x60] sm:$0xff]
        %v219 = vld [vmem:[%s178 + $0x68] sm:$0xff]
        %v220 = vld [vmem:[%s178 + $0x70] sm:$0xff]
        %v221 = vld [vmem:[%s178 + $0x78] sm:$0xff]
        %v222 = vld [vmem:[%s178 + $0x80] sm:$0xff]
        %v223 = vld [vmem:[%s178 + $0x88] sm:$0xff]
        %v224 = vld [vmem:[%s178 + $0x90] sm:$0xff]
        %v225 = vld [vmem:[%s178 + $0x98] sm:$0xff]
        %v226 = vld [vmem:[%s178 + $0xa0] sm:$0xff]
        %v227 = vld [vmem:[%s178 + $0xa8] sm:$0xff]
        %v228 = vld [vmem:[%s178 + $0xb0] sm:$0xff]
        %v229 = vld [vmem:[%s178 + $0xb8] sm:$0xff]
        %v230 = vld [vmem:[%s178 + $0xc0] sm:$0xff]
        %v231 = vld [vmem:[%s178 + $0xc8] sm:$0xff]
        %v232 = vld [vmem:[%s178 + $0xd0] sm:$0xff]
        %v233 = vld [vmem:[%s178 + $0xd8] sm:$0xff]
        %v234 = vld [vmem:[%s178 + $0xe0] sm:$0xff]
        %v235 = vld [vmem:[%s178 + $0xe8] sm:$0xff]
        %v236 = vld [vmem:[%s178 + $0xf0] sm:$0xff]
        %v237 = vld [vmem:[%s178 + $0xf8] sm:$0xff]
        %v238 = vld [vmem:[#allocation5] sm:$0xff]
        %v239 = vld [vmem:[#allocation5 + $0x8] sm:$0xff]
        %v240 = vld [vmem:[#allocation5 + $0x10] sm:$0xff]
        %v241 = vld [vmem:[#allocation5 + $0x18] sm:$0xff]
        %v242 = vld [vmem:[#allocation5 + $0x20] sm:$0xff]
        %v243 = vld [vmem:[#allocation5 + $0x28] sm:$0xff]
        %v244 = vld [vmem:[#allocation5 + $0x30] sm:$0xff]
        %v245 = vld [vmem:[#allocation5 + $0x38] sm:$0xff]
        %v246 = vld [vmem:[#allocation5 + $0x40] sm:$0xff]
        %v247 = vld [vmem:[#allocation5 + $0x48] sm:$0xff]
        %v248 = vld [vmem:[#allocation5 + $0x50] sm:$0xff]
        %v249 = vld [vmem:[#allocation5 + $0x58] sm:$0xff]
        %v250 = vld [vmem:[#allocation5 + $0x60] sm:$0xff]
        %v251 = vld [vmem:[#allocation5 + $0x68] sm:$0xff]
        %v252 = vld [vmem:[#allocation5 + $0x70] sm:$0xff]
        %v253 = vld [vmem:[#allocation5 + $0x78] sm:$0xff]
        %v254 = vld [vmem:[#allocation5 + $0x80] sm:$0xff]
        %v255 = vld [vmem:[#allocation5 + $0x88] sm:$0xff]
        %v256 = vld [vmem:[#allocation5 + $0x90] sm:$0xff]
        %v257 = vld [vmem:[#allocation5 + $0x98] sm:$0xff]
        %v258 = vld [vmem:[#allocation5 + $0xa0] sm:$0xff]
        %v259 = vld [vmem:[#allocation5 + $0xa8] sm:$0xff]
        %v260 = vld [vmem:[#allocation5 + $0xb0] sm:$0xff]
        %v261 = vld [vmem:[#allocation5 + $0xb8] sm:$0xff]
        %v262 = vld [vmem:[#allocation5 + $0xc0] sm:$0xff]
        %v263 = vld [vmem:[#allocation5 + $0xc8] sm:$0xff]
        %v264 = vld [vmem:[#allocation5 + $0xd0] sm:$0xff]
        %v265 = vld [vmem:[#allocation5 + $0xd8] sm:$0xff]
        %v266 = vld [vmem:[#allocation5 + $0xe0] sm:$0xff]
        %v267 = vld [vmem:[#allocation5 + $0xe8] sm:$0xff]
        %v268 = vld [vmem:[#allocation5 + $0xf0] sm:$0xff]
        %v269 = vld [vmem:[#allocation5 + $0xf8] sm:$0xff]
        %v270 = vld [vmem:[%s2] sm:$0xff]
        %v271 = vld [vmem:[%s2 + $0x8] sm:$0xff]
        %v272 = vld [vmem:[%s2 + $0x10] sm:$0xff]
        %v273 = vld [vmem:[%s2 + $0x18] sm:$0xff]
        %v274 = vld [vmem:[%s2 + $0x20] sm:$0xff]
        %v275 = vld [vmem:[%s2 + $0x28] sm:$0xff]
        %v276 = vld [vmem:[%s2 + $0x30] sm:$0xff]
        %v277 = vld [vmem:[%s2 + $0x38] sm:$0xff]
        %v278 = vld [vmem:[%s2 + $0x40] sm:$0xff]
        %v279 = vld [vmem:[%s2 + $0x48] sm:$0xff]
        %v280 = vld [vmem:[%s2 + $0x50] sm:$0xff]
        %v281 = vld [vmem:[%s2 + $0x58] sm:$0xff]
        %v282 = vld [vmem:[%s2 + $0x60] sm:$0xff]
        %v283 = vld [vmem:[%s2 + $0x68] sm:$0xff]
        %v284 = vld [vmem:[%s2 + $0x70] sm:$0xff]
        %v285 = vld [vmem:[%s2 + $0x78] sm:$0xff]
        %v286 = vmul.f32 %v206, %v206
        %v287 = vmul.f32 %v207, %v207
        %v288 = vmul.f32 %v208, %v208
        %v289 = vmul.f32 %v209, %v209
        %v290 = vmul.f32 %v210, %v210
        %v291 = vmul.f32 %v211, %v211
        %v292 = vmul.f32 %v212, %v212
        %v293 = vmul.f32 %v213, %v213
        %v294 = vmul.f32 %v214, %v214
        %v295 = vmul.f32 %v215, %v215
        %v296 = vmul.f32 %v216, %v216
        %v297 = vmul.f32 %v217, %v217
        %v298 = vmul.f32 %v218, %v218
        %v299 = vmul.f32 %v219, %v219
        %v300 = vmul.f32 %v220, %v220
        %v301 = vmul.f32 %v221, %v221
        %v302 = vmul.f32 %v222, %v222
        %v303 = vmul.f32 %v223, %v223
        %v304 = vmul.f32 %v224, %v224
        %v305 = vmul.f32 %v225, %v225
        %v306 = vmul.f32 %v226, %v226
        %v307 = vmul.f32 %v227, %v227
        %v308 = vmul.f32 %v228, %v228
        %v309 = vmul.f32 %v229, %v229
        %v310 = vmul.f32 %v230, %v230
        %v311 = vmul.f32 %v231, %v231
        %v312 = vmul.f32 %v232, %v232
        %v313 = vmul.f32 %v233, %v233
        %v314 = vmul.f32 %v234, %v234
        %v315 = vmul.f32 %v235, %v235
        %v316 = vmul.f32 %v236, %v236
        %v317 = vmul.f32 %v237, %v237
        %v318 = vadd.f32 %v286, %v287
        %v319 = vadd.f32 %v318, %v288
        %v320 = vadd.f32 %v319, %v289
        %v321 = vadd.f32 %v320, %v290
        %v322 = vadd.f32 %v321, %v291
        %v323 = vadd.f32 %v322, %v292
        %v324 = vadd.f32 %v323, %v293
        %v325 = vadd.f32 %v324, %v294
        %v326 = vadd.f32 %v325, %v295
        %v327 = vadd.f32 %v326, %v296
        %v328 = vadd.f32 %v327, %v297
        %v329 = vadd.f32 %v328, %v298
        %v330 = vadd.f32 %v329, %v299
        %v331 = vadd.f32 %v330, %v300
        %v332 = vadd.f32 %v331, %v301
        %v333 = vadd.f32 %v332, %v302
        %v334 = vadd.f32 %v333, %v303
        %v335 = vadd.f32 %v334, %v304
        %v336 = vadd.f32 %v335, %v305
        %v337 = vadd.f32 %v336, %v306
        %v338 = vadd.f32 %v337, %v307
        %v339 = vadd.f32 %v338, %v308
        %v340 = vadd.f32 %v339, %v309
        %v341 = vadd.f32 %v340, %v310
        %v342 = vadd.f32 %v341, %v311
        %v343 = vadd.f32 %v342, %v312
        %v344 = vadd.f32 %v343, %v313
        %v345 = vadd.f32 %v344, %v314
        %v346 = vadd.f32 %v345, %v315
        %v347 = vadd.f32 %v346, %v316
        %v348 = vadd.f32 %v347, %v317
        %v349 = vrot.slane %v348, 4
        %v350 = vadd.f32 %v348, %v349
        %v351 = vrot.slane %v350, 2
        %v352 = vadd.f32 %v350, %v351
        %v353 = vrot.slane %v352, 1
        %v354 = vadd.f32 %v352, %v353
        %355 = vmatpush.msra.mxu0 %v221
        %356 = vmatpush.msra.mxu0 %v220
        %357 = vmatpush.msra.mxu0 %v219
        %358 = vmatpush.msra.mxu0 %v218
        %359 = vmatpush.msra.mxu0 %v217
        %360 = vmatpush.msra.mxu0 %v216
        %361 = vmatpush.msra.mxu0 %v215
        %362 = vmatpush.msra.mxu0 %v214
        %363 = vmatpush.msra.mxu0 %v213
        %364 = vmatpush.msra.mxu0 %v212
        %365 = vmatpush.msra.mxu0 %v211
        %366 = vmatpush.msra.mxu0 %v210
        %367 = vmatpush.msra.mxu0 %v209
        %368 = vmatpush.msra.mxu0 %v208
        %369 = vmatpush.msra.mxu0 %v207
        %370 = vmatpush.msra.mxu0 %v206
        %371 = vmatmul.f32.gmra.mxu0 %v238
        %v372 = vpop.f32.mrf.mxu0
        %v373 = vadd.f32 0.0, %v372
        %374 = vmatmul.f32.gmra.mxu0 %v240
        %v375 = vpop.f32.mrf.mxu0
        %v376 = vadd.f32 0.0, %v375
        %377 = vmatmul.f32.gmra.mxu0 %v242
        %v378 = vpop.f32.mrf.mxu0
        %v379 = vadd.f32 0.0, %v378
        %380 = vmatmul.f32.gmra.mxu0 %v244
        %v381 = vpop.f32.mrf.mxu0
        %v382 = vadd.f32 0.0, %v381
        %383 = vmatmul.f32.gmra.mxu0 %v246
        %v384 = vpop.f32.mrf.mxu0
        %v385 = vadd.f32 0.0, %v384
        %386 = vmatmul.f32.gmra.mxu0 %v248
        %v387 = vpop.f32.mrf.mxu0
        %v388 = vadd.f32 0.0, %v387
        %389 = vmatmul.f32.gmra.mxu0 %v250
        %v390 = vpop.f32.mrf.mxu0
        %v391 = vadd.f32 0.0, %v390
        %392 = vmatmul.f32.gmra.mxu0 %v252
        %v393 = vpop.f32.mrf.mxu0
        %v394 = vadd.f32 0.0, %v393
        %395 = vmatmul.f32.gmra.mxu0 %v254
        %v396 = vpop.f32.mrf.mxu0
        %v397 = vadd.f32 0.0, %v396
        %398 = vmatmul.f32.gmra.mxu0 %v256
        %v399 = vpop.f32.mrf.mxu0
        %v400 = vadd.f32 0.0, %v399
        %401 = vmatmul.f32.gmra.mxu0 %v258
        %v402 = vpop.f32.mrf.mxu0
        %v403 = vadd.f32 0.0, %v402
        %404 = vmatmul.f32.gmra.mxu0 %v260
        %v405 = vpop.f32.mrf.mxu0
        %v406 = vadd.f32 0.0, %v405
        %407 = vmatmul.f32.gmra.mxu0 %v262
        %v408 = vpop.f32.mrf.mxu0
        %v409 = vadd.f32 0.0, %v408
        %410 = vmatmul.f32.gmra.mxu0 %v264
        %v411 = vpop.f32.mrf.mxu0
        %v412 = vadd.f32 0.0, %v411
        %413 = vmatmul.f32.gmra.mxu0 %v266
        %v414 = vpop.f32.mrf.mxu0
        %v415 = vadd.f32 0.0, %v414
        %416 = vmatmul.f32.gmra.mxu0 %v268
        %v417 = vpop.f32.mrf.mxu0
        %v418 = vadd.f32 0.0, %v417
        %419 = vdwg.mxu0
        %420 = vmatpush.msra.mxu0 %v237
        %421 = vmatpush.msra.mxu0 %v236
        %422 = vmatpush.msra.mxu0 %v235
        %423 = vmatpush.msra.mxu0 %v234
        %424 = vmatpush.msra.mxu0 %v233
        %425 = vmatpush.msra.mxu0 %v232
        %426 = vmatpush.msra.mxu0 %v231
        %427 = vmatpush.msra.mxu0 %v230
        %428 = vmatpush.msra.mxu0 %v229
        %429 = vmatpush.msra.mxu0 %v228
        %430 = vmatpush.msra.mxu0 %v227
        %431 = vmatpush.msra.mxu0 %v226
        %432 = vmatpush.msra.mxu0 %v225
        %433 = vmatpush.msra.mxu0 %v224
        %434 = vmatpush.msra.mxu0 %v223
        %435 = vmatpush.msra.mxu0 %v222
        %436 = vmatmul.f32.gmra.mxu0 %v239
        %v437 = vpop.f32.mrf.mxu0
        %v438 = vadd.f32 %v373, %v437
        %439 = vmatmul.f32.gmra.mxu0 %v241
        %v440 = vpop.f32.mrf.mxu0
        %v441 = vadd.f32 %v376, %v440
        %442 = vmatmul.f32.gmra.mxu0 %v243
        %v443 = vpop.f32.mrf.mxu0
        %v444 = vadd.f32 %v379, %v443
        %445 = vmatmul.f32.gmra.mxu0 %v245
        %v446 = vpop.f32.mrf.mxu0
        %v447 = vadd.f32 %v382, %v446
        %448 = vmatmul.f32.gmra.mxu0 %v247
        %v449 = vpop.f32.mrf.mxu0
        %v450 = vadd.f32 %v385, %v449
        %451 = vmatmul.f32.gmra.mxu0 %v249
        %v452 = vpop.f32.mrf.mxu0
        %v453 = vadd.f32 %v388, %v452
        %454 = vmatmul.f32.gmra.mxu0 %v251
        %v455 = vpop.f32.mrf.mxu0
        %v456 = vadd.f32 %v391, %v455
        %457 = vmatmul.f32.gmra.mxu0 %v253
        %v458 = vpop.f32.mrf.mxu0
        %v459 = vadd.f32 %v394, %v458
        %460 = vmatmul.f32.gmra.mxu0 %v255
        %v461 = vpop.f32.mrf.mxu0
        %v462 = vadd.f32 %v397, %v461
        %463 = vmatmul.f32.gmra.mxu0 %v257
        %v464 = vpop.f32.mrf.mxu0
        %v465 = vadd.f32 %v400, %v464
        %466 = vmatmul.f32.gmra.mxu0 %v259
        %v467 = vpop.f32.mrf.mxu0
        %v468 = vadd.f32 %v403, %v467
        %469 = vmatmul.f32.gmra.mxu0 %v261
        %v470 = vpop.f32.mrf.mxu0
        %v471 = vadd.f32 %v406, %v470
        %472 = vmatmul.f32.gmra.mxu0 %v263
        %v473 = vpop.f32.mrf.mxu0
        %v474 = vadd.f32 %v409, %v473
        %475 = vmatmul.f32.gmra.mxu0 %v265
        %v476 = vpop.f32.mrf.mxu0
        %v477 = vadd.f32 %v412, %v476
        %478 = vmatmul.f32.gmra.mxu0 %v267
        %v479 = vpop.f32.mrf.mxu0
        %v480 = vadd.f32 %v415, %v479
        %481 = vmatmul.f32.gmra.mxu0 %v269
        %v482 = vpop.f32.mrf.mxu0
        %v483 = vadd.f32 %v418, %v482
        %484 = vdwg.mxu0
        %486 = vset.pattern.permute.xlu0 0
        %487 = vperm.xlu0 %486, %v270
        %v488 = vpop.permute.xlu0 %487
        %491 = vset.pattern.permute.xlu0 0
        %492 = vperm.xlu0 %491, %v271
        %v493 = vpop.permute.xlu0 %492
        %496 = vset.pattern.permute.xlu0 0
        %497 = vperm.xlu0 %496, %v272
        %v498 = vpop.permute.xlu0 %497
        %501 = vset.pattern.permute.xlu0 0
        %502 = vperm.xlu0 %501, %v273
        %v503 = vpop.permute.xlu0 %502
        %506 = vset.pattern.permute.xlu0 0
        %507 = vperm.xlu0 %506, %v274
        %v508 = vpop.permute.xlu0 %507
        %511 = vset.pattern.permute.xlu0 0
        %512 = vperm.xlu0 %511, %v275
        %v513 = vpop.permute.xlu0 %512
        %516 = vset.pattern.permute.xlu0 0
        %517 = vperm.xlu0 %516, %v276
        %v518 = vpop.permute.xlu0 %517
        %521 = vset.pattern.permute.xlu0 0
        %522 = vperm.xlu0 %521, %v277
        %v523 = vpop.permute.xlu0 %522
        %526 = vset.pattern.permute.xlu0 0
        %527 = vperm.xlu0 %526, %v278
        %v528 = vpop.permute.xlu0 %527
        %531 = vset.pattern.permute.xlu0 0
        %532 = vperm.xlu0 %531, %v279
        %v533 = vpop.permute.xlu0 %532
        %536 = vset.pattern.permute.xlu0 0
        %537 = vperm.xlu0 %536, %v280
        %v538 = vpop.permute.xlu0 %537
        %541 = vset.pattern.permute.xlu0 0
        %542 = vperm.xlu0 %541, %v281
        %v543 = vpop.permute.xlu0 %542
        %546 = vset.pattern.permute.xlu0 0
        %547 = vperm.xlu0 %546, %v282
        %v548 = vpop.permute.xlu0 %547
        %551 = vset.pattern.permute.xlu0 0
        %552 = vperm.xlu0 %551, %v283
        %v553 = vpop.permute.xlu0 %552
        %556 = vset.pattern.permute.xlu0 0
        %557 = vperm.xlu0 %556, %v284
        %v558 = vpop.permute.xlu0 %557
        %561 = vset.pattern.permute.xlu0 0
        %562 = vperm.xlu0 %561, %v285
        %v563 = vpop.permute.xlu0 %562
        %v565 = vadd.f32 %v488, %v354
        %v566 = vadd.f32 %v493, %v354
        %v567 = vadd.f32 %v498, %v354
        %v568 = vadd.f32 %v503, %v354
        %v569 = vadd.f32 %v508, %v354
        %v570 = vadd.f32 %v513, %v354
        %v571 = vadd.f32 %v518, %v354
        %v572 = vadd.f32 %v523, %v354
        %v573 = vadd.f32 %v528, %v354
        %v574 = vadd.f32 %v533, %v354
        %v575 = vadd.f32 %v538, %v354
        %v576 = vadd.f32 %v543, %v354
        %v577 = vadd.f32 %v548, %v354
        %v578 = vadd.f32 %v553, %v354
        %v579 = vadd.f32 %v558, %v354
        %v580 = vadd.f32 %v563, %v354
        %v581 = vmul.f32 %v438, 2.0
        %v582 = vmul.f32 %v441, 2.0
        %v583 = vmul.f32 %v444, 2.0
        %v584 = vmul.f32 %v447, 2.0
        %v585 = vmul.f32 %v450, 2.0
        %v586 = vmul.f32 %v453, 2.0
        %v587 = vmul.f32 %v456, 2.0
        %v588 = vmul.f32 %v459, 2.0
        %v589 = vmul.f32 %v462, 2.0
        %v590 = vmul.f32 %v465, 2.0
        %v591 = vmul.f32 %v468, 2.0
        %v592 = vmul.f32 %v471, 2.0
        %v593 = vmul.f32 %v474, 2.0
        %v594 = vmul.f32 %v477, 2.0
        %v595 = vmul.f32 %v480, 2.0
        %v596 = vmul.f32 %v483, 2.0
        %v597 = vsub.f32 %v565, %v581
        %v598 = vsub.f32 %v566, %v582
        %v599 = vsub.f32 %v567, %v583
        %v600 = vsub.f32 %v568, %v584
        %v601 = vsub.f32 %v569, %v585
        %v602 = vsub.f32 %v570, %v586
        %v603 = vsub.f32 %v571, %v587
        %v604 = vsub.f32 %v572, %v588
        %v605 = vsub.f32 %v573, %v589
        %v606 = vsub.f32 %v574, %v590
        %v607 = vsub.f32 %v575, %v591
        %v608 = vsub.f32 %v576, %v592
        %v609 = vsub.f32 %v577, %v593
        %v610 = vsub.f32 %v578, %v594
        %v611 = vsub.f32 %v579, %v595
        %v612 = vsub.f32 %v580, %v596
        %v613 = vmax.f32 %v597, 0.0
        %v614 = vmax.f32 %v598, 0.0
        %v615 = vmax.f32 %v599, 0.0
        %v616 = vmax.f32 %v600, 0.0
        %v617 = vmax.f32 %v601, 0.0
        %v618 = vmax.f32 %v602, 0.0
        %v619 = vmax.f32 %v603, 0.0
        %v620 = vmax.f32 %v604, 0.0
        %v621 = vmax.f32 %v605, 0.0
        %v622 = vmax.f32 %v606, 0.0
        %v623 = vmax.f32 %v607, 0.0
        %v624 = vmax.f32 %v608, 0.0
        %v625 = vmax.f32 %v609, 0.0
        %v626 = vmax.f32 %v610, 0.0
        %v627 = vmax.f32 %v611, 0.0
        %v628 = vmax.f32 %v612, 0.0
        %v629 = vmul.f32 %v613, -0.005
        %v630 = vmul.f32 %v614, -0.005
        %v631 = vmul.f32 %v615, -0.005
        %v632 = vmul.f32 %v616, -0.005
        %v633 = vmul.f32 %v617, -0.005
        %v634 = vmul.f32 %v618, -0.005
        %v635 = vmul.f32 %v619, -0.005
        %v636 = vmul.f32 %v620, -0.005
        %v637 = vmul.f32 %v621, -0.005
        %v638 = vmul.f32 %v622, -0.005
        %v639 = vmul.f32 %v623, -0.005
        %v640 = vmul.f32 %v624, -0.005
        %v641 = vmul.f32 %v625, -0.005
        %v642 = vmul.f32 %v626, -0.005
        %v643 = vmul.f32 %v627, -0.005
        %v644 = vmul.f32 %v628, -0.005
        %v645 = vmul.f32 %v629, 1.442695
        %v646 = vpow.pop %v645
        %v647 = vmul.f32 %v630, 1.442695
        %v648 = vpow.pop %v647
        %v649 = vmul.f32 %v631, 1.442695
        %v650 = vpow.pop %v649
        %v651 = vmul.f32 %v632, 1.442695
        %v652 = vpow.pop %v651
        %v653 = vmul.f32 %v633, 1.442695
        %v654 = vpow.pop %v653
        %v655 = vmul.f32 %v634, 1.442695
        %v656 = vpow.pop %v655
        %v657 = vmul.f32 %v635, 1.442695
        %v658 = vpow.pop %v657
        %v659 = vmul.f32 %v636, 1.442695
        %v660 = vpow.pop %v659
        %v661 = vmul.f32 %v637, 1.442695
        %v662 = vpow.pop %v661
        %v663 = vmul.f32 %v638, 1.442695
        %v664 = vpow.pop %v663
        %v665 = vmul.f32 %v639, 1.442695
        %v666 = vpow.pop %v665
        %v667 = vmul.f32 %v640, 1.442695
        %v668 = vpow.pop %v667
        %v669 = vmul.f32 %v641, 1.442695
        %v670 = vpow.pop %v669
        %v671 = vmul.f32 %v642, 1.442695
        %v672 = vpow.pop %v671
        %v673 = vmul.f32 %v643, 1.442695
        %v674 = vpow.pop %v673
        %v675 = vmul.f32 %v644, 1.442695
        %v676 = vpow.pop %v675
        %677 = vset.pattern.permute.xlu0 1
        %678 = vperm.xlu0 %677, %v270
        %v679 = vpop.permute.xlu0 %678
        %681 = vset.pattern.permute.xlu0 1
        %682 = vperm.xlu0 %681, %v271
        %v683 = vpop.permute.xlu0 %682
        %685 = vset.pattern.permute.xlu0 1
        %686 = vperm.xlu0 %685, %v272
        %v687 = vpop.permute.xlu0 %686
        %689 = vset.pattern.permute.xlu0 1
        %690 = vperm.xlu0 %689, %v273
        %v691 = vpop.permute.xlu0 %690
        %693 = vset.pattern.permute.xlu0 1
        %694 = vperm.xlu0 %693, %v274
        %v695 = vpop.permute.xlu0 %694
        %697 = vset.pattern.permute.xlu0 1
        %698 = vperm.xlu0 %697, %v275
        %v699 = vpop.permute.xlu0 %698
        %701 = vset.pattern.permute.xlu0 1
        %702 = vperm.xlu0 %701, %v276
        %v703 = vpop.permute.xlu0 %702
        %705 = vset.pattern.permute.xlu0 1
        %706 = vperm.xlu0 %705, %v277
        %v707 = vpop.permute.xlu0 %706
        %709 = vset.pattern.permute.xlu0 1
        %710 = vperm.xlu0 %709, %v278
        %v711 = vpop.permute.xlu0 %710
        %713 = vset.pattern.permute.xlu0 1
        %714 = vperm.xlu0 %713, %v279
        %v715 = vpop.permute.xlu0 %714
        %717 = vset.pattern.permute.xlu0 1
        %718 = vperm.xlu0 %717, %v280
        %v719 = vpop.permute.xlu0 %718
        %721 = vset.pattern.permute.xlu0 1
        %722 = vperm.xlu0 %721, %v281
        %v723 = vpop.permute.xlu0 %722
        %725 = vset.pattern.permute.xlu0 1
        %726 = vperm.xlu0 %725, %v282
        %v727 = vpop.permute.xlu0 %726
        %729 = vset.pattern.permute.xlu0 1
        %730 = vperm.xlu0 %729, %v283
        %v731 = vpop.permute.xlu0 %730
        %733 = vset.pattern.permute.xlu0 1
        %734 = vperm.xlu0 %733, %v284
        %v735 = vpop.permute.xlu0 %734
        %737 = vset.pattern.permute.xlu0 1
        %738 = vperm.xlu0 %737, %v285
        %v739 = vpop.permute.xlu0 %738
        %v741 = vmul.f32 %v679, %v646
        %v742 = vmul.f32 %v683, %v648
        %v743 = vmul.f32 %v687, %v650
        %v744 = vmul.f32 %v691, %v652
        %v745 = vmul.f32 %v695, %v654
        %v746 = vmul.f32 %v699, %v656
        %v747 = vmul.f32 %v703, %v658
        %v748 = vmul.f32 %v707, %v660
        %v749 = vmul.f32 %v711, %v662
        %v750 = vmul.f32 %v715, %v664
        %v751 = vmul.f32 %v719, %v666
        %v752 = vmul.f32 %v723, %v668
        %v753 = vmul.f32 %v727, %v670
        %v754 = vmul.f32 %v731, %v672
        %v755 = vmul.f32 %v735, %v674
        %v756 = vmul.f32 %v739, %v676
        %v757 = vadd.f32 %v741, %v742
        %v758 = vadd.f32 %v757, %v743
        %v759 = vadd.f32 %v758, %v744
        %v760 = vadd.f32 %v759, %v745
        %v761 = vadd.f32 %v760, %v746
        %v762 = vadd.f32 %v761, %v747
        %v763 = vadd.f32 %v762, %v748
        %v764 = vadd.f32 %v763, %v749
        %v765 = vadd.f32 %v764, %v750
        %v766 = vadd.f32 %v765, %v751
        %v767 = vadd.f32 %v766, %v752
        %v768 = vadd.f32 %v767, %v753
        %v769 = vadd.f32 %v768, %v754
        %v770 = vadd.f32 %v769, %v755
        %v771 = vadd.f32 %v770, %v756
        %v772 = vrot.slane %v771, 4
        %v773 = vadd.f32 %v771, %v772
        %v774 = vrot.slane %v773, 2
        %v775 = vadd.f32 %v773, %v774
        %v776 = vrot.slane %v775, 1
        %v777 = vadd.f32 %v775, %v776
        %v778 = vadd.f32 %v777, 0.1
        %vm779 = vcmp.gt.f32.partialorder %v778, 0.0
        %v780 = vsel %vm779, 1.0, 0.0
        %781 = vst [vmem:[%s205] sm:$0x1] %v780
        %s782 = sand.u32 %s97, 1
        %s783 = scalar_lea.sflag [#allocation4], %s782
        %s784 = sand.u32 %s97, 1
        %s785 = scalar_lea.vmem [#allocation7], %s784
        // Predicated region
        $region41: #{tpu_custom_call.1} parent=31 // pred_check
          %p786 = pneg %p107
        $region42: #{tpu_custom_call.1} parent=31 // pred_check_branch
          %788 = sbr.rel (%p786) target = $region44
        $region43: #{tpu_custom_call.1} parent=31 // pred_region
          %790 = vsyncadd %s783, 0
          %s791 = scalar_lea.hbm %s3, %s21
          %s793 = sshll.u32 %s785, 4
          %s794 = int_to_ptr.vmem [resolvable:$true] %s793
          %s795 = sshll.u32 %s791, 4
          %s796 = int_to_ptr.hbm [resolvable:$true] %s795
          %798 = dma.vmem_to_hbm [thread:$0]  %s794, 16, %s796, %s783
        $region44: #{tpu_custom_call.1} parent=31 // pred_fallthru
          _
      $region32: #{tpu_custom_call.1} parent=5 // pred_fallthru
        _
      %p799 = scmp.le.s32.totalorder 2, %s16
      // Predicated region
      $region45: #{tpu_custom_call.1} parent=5 // pred_check
        %p800 = pneg %p799
      $region46: #{tpu_custom_call.1} parent=5 // pred_check_branch
        %802 = sbr.rel (%p800) target = $region48
      $region47: #{tpu_custom_call.1} parent=5 // pred_region
        %s803 = ssub.s32 %s16, 2
        // Predicated region
        $region49: #{tpu_custom_call.1} parent=47 // pred_check
          %p804 = pneg %p113
        $region50: #{tpu_custom_call.1} parent=47 // pred_check_branch
          %806 = sbr.rel (%p804) target = $region52
        $region51: #{tpu_custom_call.1} parent=47 // pred_region
          %s807 = sand.u32 %s98, 1
          %s808 = scalar_lea.sflag [#allocation4], %s807
          %s809 = sand.u32 %s98, 1
          %s810 = scalar_lea.vmem [#allocation7], %s809
          %812 = dma.done %s808, 16
        $region52: #{tpu_custom_call.1} parent=47 // pred_fallthru
          _
      $region48: #{tpu_custom_call.1} parent=5 // pred_fallthru
        _
    $region6: #{tpu_custom_call.1} parent=1 // loop_footer
      %s20 = sadd.s32 1, %s16
    $region7: #{tpu_custom_call.1} parent=1 // loop_footer_branch
      %15 = sbr.rel target = $region3
    $region8: #{tpu_custom_call.1} parent=1 // loop_exit
      _
    %813 = vsyncpa [#allocation3], 1
    %s814 = scalar_lea.sflag [#allocation3], 1
    %815 = vsyncpa %s814, 1
    %816 = vsyncpa [#allocation6], 1
    %817 = vsyncpa [#allocation4], 1
    %s818 = scalar_lea.sflag [#allocation4], 1
    %819 = vsyncpa %s818, 1

</llo_original>
